<compile_context>
chip_gen: v7x
topology: tpu7x:2x2x1
jax: 0.10.0
libtpu: 0.0.40
codegen_flags: <defaults>
</compile_context>

<pallas_src>
import jax
import jax.numpy as jnp
from jax.experimental import pallas as pl
from jax.experimental.pallas import tpu as pltpu


def _vector_bt_kernel(i_ref, j_ref, k_ref, uT_ref, vT_ref, out_ref):
    """Scores TB pairs per grid step.

    i_ref / j_ref / k_ref : (1, TB) int32 index tiles (batch on the lane axis).
    uT_ref / vT_ref       : (d, num_models) VMEM-resident transposed tables.
    out_ref               : (1, TB) float32 sigmoid scores (lane-dense).
    """
    num_models = uT_ref.shape[1]
    tb = i_ref.shape[1]

    # One-hot selection matrices, (num_models, TB).
    model_ids = jax.lax.broadcasted_iota(jnp.int32, (num_models, tb), 0)
    onehot_i = (model_ids == i_ref[...]).astype(jnp.float32)
    onehot_j = (model_ids == j_ref[...]).astype(jnp.float32)
    onehot_k = (model_ids == k_ref[...]).astype(jnp.float32)

    uT = uT_ref[...].astype(jnp.float32)   # (d, num_models)
    vT = vT_ref[...].astype(jnp.float32)   # (d, num_models)

    # Gather-by-matmul on the MXU (exact in f32: picks of single rows):
    #   u_iT[f, b]  = u[i_idx[b], f]
    #   diffT[f, b] = v[j_idx[b], f] - v[k_idx[b], f]
    u_iT = jnp.dot(uT, onehot_i, preferred_element_type=jnp.float32)            # (d, TB)
    diffT = jnp.dot(vT, onehot_j - onehot_k, preferred_element_type=jnp.float32)  # (d, TB)

    # <u_i, v_j - v_k>, reduced over the feature (sublane) axis -> (1, TB).
    scores = jnp.sum(u_iT * diffT, axis=0, keepdims=True)
    out_ref[...] = jax.nn.sigmoid(scores)


def vector_bt_forward(u_weight, v_weight, i_idx, j_idx, k_idx, tile_b=128):
    """Pallas equivalent of VectorBT.forward.

    u_weight, v_weight : (num_models, d) float tables.
    i_idx, j_idx, k_idx: (B,) integer index vectors.
    Returns (B,) float32 sigmoid(<u_i, v_j> - <u_i, v_k>).
    """
    B = i_idx.shape[0]
    num_models, d = u_weight.shape

    num_tiles = pl.cdiv(B, tile_b)
    b_padded = num_tiles * tile_b

    def prep_idx(idx):
        idx = idx.astype(jnp.int32)
        idx = jnp.pad(idx, (0, b_padded - B))          # pad with a valid index (0)
        return idx.reshape(num_tiles, tile_b)

    i2 = prep_idx(i_idx)
    j2 = prep_idx(j_idx)
    k2 = prep_idx(k_idx)

    # Pre-transpose once in the wrapper so the kernel sees (d, num_models)
    # tables and keeps batch on the lane axis throughout.
    uT = jnp.transpose(u_weight)
    vT = jnp.transpose(v_weight)

    grid_spec = pltpu.PrefetchScalarGridSpec(
        num_scalar_prefetch=0,
        grid=(num_tiles,),
        in_specs=[
            pl.BlockSpec((1, tile_b), lambda t: (t, 0)),          # i indices
            pl.BlockSpec((1, tile_b), lambda t: (t, 0)),          # j indices
            pl.BlockSpec((1, tile_b), lambda t: (t, 0)),          # k indices
            pl.BlockSpec((d, num_models), lambda t: (0, 0)),      # u.T (resident)
            pl.BlockSpec((d, num_models), lambda t: (0, 0)),      # v.T (resident, passed once)
        ],
        out_specs=pl.BlockSpec((1, tile_b), lambda t: (t, 0)),    # lane-dense row
    )

    out = pl.pallas_call(
        _vector_bt_kernel,
        grid_spec=grid_spec,
        out_shape=jax.ShapeDtypeStruct((num_tiles, tile_b), jnp.float32),
        compiler_params=pltpu.CompilerParams(
            dimension_semantics=("parallel",)),
    )(i2, j2, k2, uT, vT)

    return out.reshape(b_padded)[:B]


def vector_bt_reference(u_weight, v_weight, i_idx, j_idx, k_idx):
    u_i = u_weight[i_idx]
    v_j = v_weight[j_idx]
    v_k = v_weight[k_idx]
    score_j = jnp.sum(u_i * v_j, axis=-1)
    score_k = jnp.sum(u_i * v_k, axis=-1)
    return jax.nn.sigmoid(score_j - score_k)


if __name__ == "__main__":
    num_models, d, batch = 16, 32, 8

    key = jax.random.PRNGKey(0)
    ku, kv, ki, kj, kk = jax.random.split(key, 5)

    # deterministic init matching nn.init.normal_(mean=0, std=0.1)
    u_weight = 0.1 * jax.random.normal(ku, (num_models, d), dtype=jnp.float32)
    v_weight = 0.1 * jax.random.normal(kv, (num_models, d), dtype=jnp.float32)

    i_idx = jax.random.randint(ki, (batch,), 0, num_models, dtype=jnp.int32)
    j_idx = jax.random.randint(kj, (batch,), 0, num_models, dtype=jnp.int32)
    k_idx = jax.random.randint(kk, (batch,), 0, num_models, dtype=jnp.int32)

    out = vector_bt_forward(u_weight, v_weight, i_idx, j_idx, k_idx)
    out = jax.block_until_ready(out)

    ref = vector_bt_reference(u_weight, v_weight, i_idx, j_idx, k_idx)
    assert out.shape == (batch,)
    assert jnp.allclose(out, ref, atol=1e-5, rtol=1e-5), (out, ref)

    print("KERNEL_OK")
</pallas_src>

<mosaic_0001>
module attributes {stable_mosaic.version = 11 : i64} {
  func.func @_vector_bt_kernel(%arg0: i32, %arg1: memref<1x128xi32, #tpu.memory_space<vmem>>, %arg2: memref<1x128xi32, #tpu.memory_space<vmem>>, %arg3: memref<1x128xi32, #tpu.memory_space<vmem>>, %arg4: memref<32x16xf32, #tpu.memory_space<vmem>>, %arg5: memref<32x16xf32, #tpu.memory_space<vmem>>, %arg6: memref<1x128xf32, #tpu.memory_space<vmem>>) attributes {dimension_semantics = [#tpu.dimension_semantics<parallel>], iteration_bounds = array<i64: 1>, scalar_prefetch = 0 : i64, scratch_operands = 0 : i64, tpu.core_type = #tpu.core_type<tc>, window_params = [{transform_indices = @transform_0, window_bounds = array<i64: 1, 128>}, {transform_indices = @transform_1, window_bounds = array<i64: 1, 128>}, {transform_indices = @transform_2, window_bounds = array<i64: 1, 128>}, {pipeline_mode = #tpu.pipeline_mode<synchronous>, transform_indices = @transform_3, window_bounds = array<i64: 32, 16>}, {pipeline_mode = #tpu.pipeline_mode<synchronous>, transform_indices = @transform_4, window_bounds = array<i64: 32, 16>}, {transform_indices = @transform_5, window_bounds = array<i64: 1, 128>}]} {
    %0 = tpu.iota {dimensions = array<i32: 0>} : vector<16x128xi32>
    %c0 = arith.constant 0 : index
    %c0_0 = arith.constant 0 : index
    %1 = vector.load %arg1[%c0, %c0_0] : memref<1x128xi32, #tpu.memory_space<vmem>>, vector<1x128xi32>
    %2 = vector.broadcast %1 : vector<1x128xi32> to vector<16x128xi32>
    %3 = arith.cmpi eq, %0, %2 : vector<16x128xi32>
    %4 = arith.extui %3 : vector<16x128xi1> to vector<16x128xi32>
    %5 = arith.sitofp %4 : vector<16x128xi32> to vector<16x128xf32>
    %c0_1 = arith.constant 0 : index
    %c0_2 = arith.constant 0 : index
    %6 = vector.load %arg2[%c0_1, %c0_2] : memref<1x128xi32, #tpu.memory_space<vmem>>, vector<1x128xi32>
    %7 = vector.broadcast %6 : vector<1x128xi32> to vector<16x128xi32>
    %8 = arith.cmpi eq, %0, %7 : vector<16x128xi32>
    %9 = arith.extui %8 : vector<16x128xi1> to vector<16x128xi32>
    %10 = arith.sitofp %9 : vector<16x128xi32> to vector<16x128xf32>
    %c0_3 = arith.constant 0 : index
    %c0_4 = arith.constant 0 : index
    %11 = vector.load %arg3[%c0_3, %c0_4] : memref<1x128xi32, #tpu.memory_space<vmem>>, vector<1x128xi32>
    %12 = vector.broadcast %11 : vector<1x128xi32> to vector<16x128xi32>
    %13 = arith.cmpi eq, %0, %12 : vector<16x128xi32>
    %14 = arith.extui %13 : vector<16x128xi1> to vector<16x128xi32>
    %15 = arith.sitofp %14 : vector<16x128xi32> to vector<16x128xf32>
    %c0_5 = arith.constant 0 : index
    %c0_6 = arith.constant 0 : index
    %16 = vector.load %arg4[%c0_5, %c0_6] : memref<32x16xf32, #tpu.memory_space<vmem>>, vector<32x16xf32>
    %c0_7 = arith.constant 0 : index
    %c0_8 = arith.constant 0 : index
    %17 = vector.load %arg5[%c0_7, %c0_8] : memref<32x16xf32, #tpu.memory_space<vmem>>, vector<32x16xf32>
    %cst = arith.constant dense<0.000000e+00> : vector<32x128xf32>
    %18 = tpu.matmul %16, %5, %cst {dimension_numbers = #tpu.dot_dimension_numbers<[1], [0], [0], [1], [0, 0, 1, 1], [], []>} : vector<32x16xf32>, vector<16x128xf32>, vector<32x128xf32> -> vector<32x128xf32>
    %19 = arith.subf %10, %15 : vector<16x128xf32>
    %cst_9 = arith.constant dense<0.000000e+00> : vector<32x128xf32>
    %20 = tpu.matmul %17, %19, %cst_9 {dimension_numbers = #tpu.dot_dimension_numbers<[1], [0], [0], [1], [0, 0, 1, 1], [], []>} : vector<32x16xf32>, vector<16x128xf32>, vector<32x128xf32> -> vector<32x128xf32>
    %21 = arith.mulf %18, %20 : vector<32x128xf32>
    %cst_10 = arith.constant dense<0.000000e+00> : vector<128xf32>
    %22 = vector.multi_reduction <add>, %21, %cst_10 [0] : vector<32x128xf32> to vector<128xf32>
    %23 = vector.shape_cast %22 : vector<128xf32> to vector<1x128xf32>
    %24 = arith.negf %23 : vector<1x128xf32>
    %25 = math.exp %24 : vector<1x128xf32>
    %cst_11 = arith.constant 1.000000e+00 : f32
    %26 = vector.broadcast %cst_11 : f32 to vector<1x128xf32>
    %27 = arith.addf %26, %25 : vector<1x128xf32>
    %28 = arith.divf %26, %27 : vector<1x128xf32>
    %c0_12 = arith.constant 0 : index
    %c0_13 = arith.constant 0 : index
    %29 = vector.load %arg6[%c0_12, %c0_13] : memref<1x128xf32, #tpu.memory_space<vmem>>, vector<1x128xf32>
    tpu.vector_store %arg6[%c0_12, %c0_13], %28 {strides = array<i32>} : memref<1x128xf32, #tpu.memory_space<vmem>>, vector<1x128xf32>,
    return
  }
  func.func @transform_0(%arg0: i32) -> (i32, i32) {
    %c0_i32 = arith.constant 0 : i32
    %c0_i32_0 = arith.constant 0 : i32
    return %arg0, %c0_i32 : i32, i32
  }
  func.func @transform_1(%arg0: i32) -> (i32, i32) {
    %c0_i32 = arith.constant 0 : i32
    %c0_i32_0 = arith.constant 0 : i32
    return %arg0, %c0_i32 : i32, i32
  }
  func.func @transform_2(%arg0: i32) -> (i32, i32) {
    %c0_i32 = arith.constant 0 : i32
    %c0_i32_0 = arith.constant 0 : i32
    return %arg0, %c0_i32 : i32, i32
  }
  func.func @transform_3(%arg0: i32) -> (i32, i32) {
    %c0_i32 = arith.constant 0 : i32
    %c0_i32_0 = arith.constant 0 : i32
    %c0_i32_1 = arith.constant 0 : i32
    return %c0_i32, %c0_i32_0 : i32, i32
  }
  func.func @transform_4(%arg0: i32) -> (i32, i32) {
    %c0_i32 = arith.constant 0 : i32
    %c0_i32_0 = arith.constant 0 : i32
    %c0_i32_1 = arith.constant 0 : i32
    return %c0_i32, %c0_i32_0 : i32, i32
  }
  func.func @transform_5(%arg0: i32) -> (i32, i32) {
    %c0_i32 = arith.constant 0 : i32
    %c0_i32_0 = arith.constant 0 : i32
    return %arg0, %c0_i32 : i32, i32
  }
}

</mosaic_0001>

<llo_original>
// kernel: tpu_custom_call.1
$region0: #{tpu_custom_call.1}
  #allocation0 [shape = 'u32[]', space=smem, size = 0x4, offset = 0x4, fixed_abs, tag = 'smem constant byte address 0x4 - core index']
  #allocation1 [shape = 'u32[144,128]{1,0:T(1,128)}', space=vmem, size = 0x12000, scoped, tag = 'internal scratch']
  %s0 = inlined_call_operand.vmem [shape: s32[1,128], index: 0, kind: input, shape index: {}]
  %s1 = inlined_call_operand.vmem [shape: s32[1,128], index: 1, kind: input, shape index: {}]
  %s2 = inlined_call_operand.vmem [shape: s32[1,128], index: 2, kind: input, shape index: {}]
  %s3 = inlined_call_operand.vmem [shape: f32[32,16], index: 3, kind: input, shape index: {}]
  %s4 = inlined_call_operand.vmem [shape: f32[32,16], index: 4, kind: input, shape index: {}]
  %s5 = inlined_call_operand.hbm [shape: f32[1,128], index: 5, kind: output, shape index: {}]
  %s6 = sld [smem:[#allocation0]]
  $region30: #{tpu_custom_call.1} parent=0
    _
  %s8 = ssub.s32 1, %s6
  %s9 = scalar_select 0, %s8, %s6
  $region1: #{tpu_custom_call.1} parent=0
    #allocation2 [shape = 'u8[512]{0}', space=vmem, size = 0x400, scoped, tag = 'output window, operand 0, single buffered']
    #allocation3 [shape = 's32[1]{0}', space=sflag, size = 0x4, scoped, tag = 'scoped memory for tpu_custom_call.1']
    %10 = vsyncpa [#allocation3], 0
    // Predicated region
    $region2: #{tpu_custom_call.1} parent=1 // pred_check
      _
    $region3: #{tpu_custom_call.1} parent=1 // pred_check_branch
      %12 = sbr.rel (0) target = $region5
    $region4: #{tpu_custom_call.1} parent=1 // pred_region
      _
    $region5: #{tpu_custom_call.1} parent=1 // pred_fallthru
      _
    // Predicated region
    $region6: #{tpu_custom_call.1} parent=1 // pred_check
      _
    $region7: #{tpu_custom_call.1} parent=1 // pred_check_branch
      %14 = sbr.rel (0) target = $region9
    $region8: #{tpu_custom_call.1} parent=1 // pred_region
      _
    $region9: #{tpu_custom_call.1} parent=1 // pred_fallthru
      _
    // Predicated region
    $region10: #{tpu_custom_call.1} parent=1 // pred_check
      _
    $region11: #{tpu_custom_call.1} parent=1 // pred_check_branch
      %16 = sbr.rel (0) target = $region13
    $region12: #{tpu_custom_call.1} parent=1 // pred_region
      _
    $region13: #{tpu_custom_call.1} parent=1 // pred_fallthru
      _
    // Predicated region
    $region14: #{tpu_custom_call.1} parent=1 // pred_check
      _
    $region15: #{tpu_custom_call.1} parent=1 // pred_check_branch
      %18 = sbr.rel (0) target = $region17
    $region16: #{tpu_custom_call.1} parent=1 // pred_region
      _
    $region17: #{tpu_custom_call.1} parent=1 // pred_fallthru
      _
    // Predicated region
    $region18: #{tpu_custom_call.1} parent=1 // pred_check
      _
    $region19: #{tpu_custom_call.1} parent=1 // pred_check_branch
      %20 = sbr.rel (0) target = $region21
    $region20: #{tpu_custom_call.1} parent=1 // pred_region
      _
    $region21: #{tpu_custom_call.1} parent=1 // pred_fallthru
      _
    %v21 = vlaneseq
    %v22 = vshrl.u32 %v21, 7
    %v23 = vadd.s32 %v22, 8
    %v24 = vld [vmem:[%s0] sm:$0x1]
    %v25 = vlaneseq
    %v26 = vshrl.u32 %v25, 7
    %v27 = vsub.s32 0, %v26
    %v28 = vrot.slane %v24, %v27
    %vm29 = vcmp.eq.s32.totalorder %v22, %v28
    %vm30 = vcmp.eq.s32.totalorder %v23, %v28
    %v31 = vsel %vm29, 1, 0
    %v32 = vsel %vm30, 1, 0
    %v33 = vcvt.s32.f32 %v31
    %v34 = vcvt.s32.f32 %v32
    %v35 = vld [vmem:[%s1] sm:$0x1]
    %v36 = vlaneseq
    %v37 = vshrl.u32 %v36, 7
    %v38 = vsub.s32 0, %v37
    %v39 = vrot.slane %v35, %v38
    %vm40 = vcmp.eq.s32.totalorder %v22, %v39
    %vm41 = vcmp.eq.s32.totalorder %v23, %v39
    %v42 = vsel %vm40, 1, 0
    %v43 = vsel %vm41, 1, 0
    %v44 = vcvt.s32.f32 %v42
    %v45 = vcvt.s32.f32 %v43
    %v46 = vld [vmem:[%s2] sm:$0x1]
    %v47 = vlaneseq
    %v48 = vshrl.u32 %v47, 7
    %v49 = vsub.s32 0, %v48
    %v50 = vrot.slane %v46, %v49
    %vm51 = vcmp.eq.s32.totalorder %v22, %v50
    %vm52 = vcmp.eq.s32.totalorder %v23, %v50
    %v53 = vsel %vm51, 1, 0
    %v54 = vsel %vm52, 1, 0
    %v55 = vcvt.s32.f32 %v53
    %v56 = vcvt.s32.f32 %v54
    %v57 = vld [vmem:[%s3] sm:$0xff]
    %v58 = vld [vmem:[%s3 + $0x8] sm:$0xff]
    %v59 = vld [vmem:[%s3 + $0x10] sm:$0xff]
    %v60 = vld [vmem:[%s3 + $0x18] sm:$0xff]
    %v61 = vld [vmem:[%s4] sm:$0xff]
    %v62 = vld [vmem:[%s4 + $0x8] sm:$0xff]
    %v63 = vld [vmem:[%s4 + $0x10] sm:$0xff]
    %v64 = vld [vmem:[%s4 + $0x18] sm:$0xff]
    %vm65 = vcmask 130048
    %v67 = vsel %vm65, %v57, 0
    %v70 = vsel %vm65, %v58, 0
    %v73 = vsel %vm65, %v59, 0
    %v76 = vsel %vm65, %v60, 0
    %78 = vmatprep.subr.mxu0 0.0
    %79 = vmatpush1.msra.mxu0 %v33
    %80 = vmatprep.subr.mxu0 0.0
    %81 = vmatpush1.msra.mxu0 %v34
    %82 = vmatprep.subr.mxu0 0.0
    %83 = vmatpush1.msra.mxu0 0.0
    %84 = vmatprep.subr.mxu0 0.0
    %85 = vmatpush1.msra.mxu0 0.0
    %86 = vmatprep.subr.mxu0 0.0
    %87 = vmatpush1.msra.mxu0 0.0
    %88 = vmatprep.subr.mxu0 0.0
    %89 = vmatpush1.msra.mxu0 0.0
    %90 = vmatprep.subr.mxu0 0.0
    %91 = vmatpush1.msra.mxu0 0.0
    %92 = vmatprep.subr.mxu0 0.0
    %93 = vmatpush1.msra.mxu0 0.0
    %94 = vmatprep.subr.mxu0 0.0
    %95 = vmatpush1.msra.mxu0 0.0
    %96 = vmatprep.subr.mxu0 0.0
    %97 = vmatpush1.msra.mxu0 0.0
    %98 = vmatprep.subr.mxu0 0.0
    %99 = vmatpush1.msra.mxu0 0.0
    %100 = vmatprep.subr.mxu0 0.0
    %101 = vmatpush1.msra.mxu0 0.0
    %102 = vmatprep.subr.mxu0 0.0
    %103 = vmatpush1.msra.mxu0 0.0
    %104 = vmatprep.subr.mxu0 0.0
    %105 = vmatpush1.msra.mxu0 0.0
    %106 = vmatprep.subr.mxu0 0.0
    %107 = vmatpush1.msra.mxu0 0.0
    %108 = vmatprep.subr.mxu0 0.0
    %109 = vmatpush1.msra.mxu0 0.0
    %110 = vmatprep.subr.mxu0 0.0
    %111 = vmatpush1.msra.mxu0 0.0
    %112 = vmatprep.subr.mxu0 0.0
    %113 = vmatpush1.msra.mxu0 0.0
    %114 = vmatprep.subr.mxu0 0.0
    %115 = vmatpush1.msra.mxu0 0.0
    %116 = vmatprep.subr.mxu0 0.0
    %117 = vmatpush1.msra.mxu0 0.0
    %118 = vmatprep.subr.mxu0 0.0
    %119 = vmatpush1.msra.mxu0 0.0
    %120 = vmatprep.subr.mxu0 0.0
    %121 = vmatpush1.msra.mxu0 0.0
    %122 = vmatprep.subr.mxu0 0.0
    %123 = vmatpush1.msra.mxu0 0.0
    %124 = vmatprep.subr.mxu0 0.0
    %125 = vmatpush1.msra.mxu0 0.0
    %126 = vmatprep.subr.mxu0 0.0
    %127 = vmatpush1.msra.mxu0 0.0
    %128 = vmatprep.subr.mxu0 0.0
    %129 = vmatpush1.msra.mxu0 0.0
    %130 = vmatprep.subr.mxu0 0.0
    %131 = vmatpush1.msra.mxu0 0.0
    %132 = vmatprep.subr.mxu0 0.0
    %133 = vmatpush1.msra.mxu0 0.0
    %134 = vmatprep.subr.mxu0 0.0
    %135 = vmatpush1.msra.mxu0 0.0
    %136 = vmatprep.subr.mxu0 0.0
    %137 = vmatpush1.msra.mxu0 0.0
    %138 = vmatprep.subr.mxu0 0.0
    %139 = vmatpush1.msra.mxu0 0.0
    %140 = vmatprep.subr.mxu0 0.0
    %141 = vmatpush1.msra.mxu0 0.0
    %142 = vmatprep.mubr.f32.mxu0 0.0
    %143 = vmatmul.mubr.f32.gmra.mrb[0].mxu0 %v67
    %v144 = vpop.f32.mrb[0].mxu0
    %v145 = vadd.f32 0.0, %v144
    %v146 = vpop.f32.mrb[0].mxu0
    %147 = vmatprep.mubr.f32.mxu0 0.0
    %148 = vmatmul.mubr.f32.gmra.mrb[0].mxu0 %v70
    %v149 = vpop.f32.mrb[0].mxu0
    %v150 = vadd.f32 0.0, %v149
    %v151 = vpop.f32.mrb[0].mxu0
    %152 = vmatprep.mubr.f32.mxu0 0.0
    %153 = vmatmul.mubr.f32.gmra.mrb[0].mxu0 %v73
    %v154 = vpop.f32.mrb[0].mxu0
    %v155 = vadd.f32 0.0, %v154
    %v156 = vpop.f32.mrb[0].mxu0
    %157 = vmatprep.mubr.f32.mxu0 0.0
    %158 = vmatmul.mubr.f32.gmra.mrb[0].mxu0 %v76
    %v159 = vpop.f32.mrb[0].mxu0
    %v160 = vadd.f32 0.0, %v159
    %v161 = vpop.f32.mrb[0].mxu0
    %162 = vdwg.mxu0
    %v163 = vsub.f32 %v44, %v55
    %v164 = vsub.f32 %v45, %v56
    %v166 = vsel %vm65, %v61, 0
    %v169 = vsel %vm65, %v62, 0
    %v172 = vsel %vm65, %v63, 0
    %v175 = vsel %vm65, %v64, 0
    %177 = vmatprep.subr.mxu0 0.0
    %178 = vmatpush1.msra.mxu0 %v163
    %179 = vmatprep.subr.mxu0 0.0
    %180 = vmatpush1.msra.mxu0 %v164
    %181 = vmatprep.subr.mxu0 0.0
    %182 = vmatpush1.msra.mxu0 0.0
    %183 = vmatprep.subr.mxu0 0.0
    %184 = vmatpush1.msra.mxu0 0.0
    %185 = vmatprep.subr.mxu0 0.0
    %186 = vmatpush1.msra.mxu0 0.0
    %187 = vmatprep.subr.mxu0 0.0
    %188 = vmatpush1.msra.mxu0 0.0
    %189 = vmatprep.subr.mxu0 0.0
    %190 = vmatpush1.msra.mxu0 0.0
    %191 = vmatprep.subr.mxu0 0.0
    %192 = vmatpush1.msra.mxu0 0.0
    %193 = vmatprep.subr.mxu0 0.0
    %194 = vmatpush1.msra.mxu0 0.0
    %195 = vmatprep.subr.mxu0 0.0
    %196 = vmatpush1.msra.mxu0 0.0
    %197 = vmatprep.subr.mxu0 0.0
    %198 = vmatpush1.msra.mxu0 0.0
    %199 = vmatprep.subr.mxu0 0.0
    %200 = vmatpush1.msra.mxu0 0.0
    %201 = vmatprep.subr.mxu0 0.0
    %202 = vmatpush1.msra.mxu0 0.0
    %203 = vmatprep.subr.mxu0 0.0
    %204 = vmatpush1.msra.mxu0 0.0
    %205 = vmatprep.subr.mxu0 0.0
    %206 = vmatpush1.msra.mxu0 0.0
    %207 = vmatprep.subr.mxu0 0.0
    %208 = vmatpush1.msra.mxu0 0.0
    %209 = vmatprep.subr.mxu0 0.0
    %210 = vmatpush1.msra.mxu0 0.0
    %211 = vmatprep.subr.mxu0 0.0
    %212 = vmatpush1.msra.mxu0 0.0
    %213 = vmatprep.subr.mxu0 0.0
    %214 = vmatpush1.msra.mxu0 0.0
    %215 = vmatprep.subr.mxu0 0.0
    %216 = vmatpush1.msra.mxu0 0.0
    %217 = vmatprep.subr.mxu0 0.0
    %218 = vmatpush1.msra.mxu0 0.0
    %219 = vmatprep.subr.mxu0 0.0
    %220 = vmatpush1.msra.mxu0 0.0
    %221 = vmatprep.subr.mxu0 0.0
    %222 = vmatpush1.msra.mxu0 0.0
    %223 = vmatprep.subr.mxu0 0.0
    %224 = vmatpush1.msra.mxu0 0.0
    %225 = vmatprep.subr.mxu0 0.0
    %226 = vmatpush1.msra.mxu0 0.0
    %227 = vmatprep.subr.mxu0 0.0
    %228 = vmatpush1.msra.mxu0 0.0
    %229 = vmatprep.subr.mxu0 0.0
    %230 = vmatpush1.msra.mxu0 0.0
    %231 = vmatprep.subr.mxu0 0.0
    %232 = vmatpush1.msra.mxu0 0.0
    %233 = vmatprep.subr.mxu0 0.0
    %234 = vmatpush1.msra.mxu0 0.0
    %235 = vmatprep.subr.mxu0 0.0
    %236 = vmatpush1.msra.mxu0 0.0
    %237 = vmatprep.subr.mxu0 0.0
    %238 = vmatpush1.msra.mxu0 0.0
    %239 = vmatprep.subr.mxu0 0.0
    %240 = vmatpush1.msra.mxu0 0.0
    %241 = vmatprep.mubr.f32.mxu0 0.0
    %242 = vmatmul.mubr.f32.gmra.mrb[0].mxu0 %v166
    %v243 = vpop.f32.mrb[0].mxu0
    %v244 = vadd.f32 0.0, %v243
    %v245 = vpop.f32.mrb[0].mxu0
    %246 = vmatprep.mubr.f32.mxu0 0.0
    %247 = vmatmul.mubr.f32.gmra.mrb[0].mxu0 %v169
    %v248 = vpop.f32.mrb[0].mxu0
    %v249 = vadd.f32 0.0, %v248
    %v250 = vpop.f32.mrb[0].mxu0
    %251 = vmatprep.mubr.f32.mxu0 0.0
    %252 = vmatmul.mubr.f32.gmra.mrb[0].mxu0 %v172
    %v253 = vpop.f32.mrb[0].mxu0
    %v254 = vadd.f32 0.0, %v253
    %v255 = vpop.f32.mrb[0].mxu0
    %256 = vmatprep.mubr.f32.mxu0 0.0
    %257 = vmatmul.mubr.f32.gmra.mrb[0].mxu0 %v175
    %v258 = vpop.f32.mrb[0].mxu0
    %v259 = vadd.f32 0.0, %v258
    %v260 = vpop.f32.mrb[0].mxu0
    %261 = vdwg.mxu0
    %v262 = vmul.f32 %v145, %v244
    %v263 = vmul.f32 %v150, %v249
    %v264 = vmul.f32 %v155, %v254
    %v265 = vmul.f32 %v160, %v259
    %v266 = vadd.f32 %v262, %v263
    %v267 = vadd.f32 %v266, %v264
    %v268 = vadd.f32 %v267, %v265
    %v269 = vrot.slane %v268, 4
    %v270 = vadd.f32 %v268, %v269
    %v271 = vrot.slane %v270, 2
    %v272 = vadd.f32 %v270, %v271
    %v273 = vrot.slane %v272, 1
    %v274 = vadd.f32 %v272, %v273
    %v275 = vxor.u32 %v274, 2147483648
    %v276 = vmul.f32 %v275, 1.442695
    %v277 = vpow.pop %v276
    %v278 = vadd.f32 %v277, 1.0
    %v279 = vrcp.pop %v278
    %v280 = vmul.f32 1.0, %v279
    %281 = vst [vmem:[#allocation2] sm:$0x1] %v280
    // Predicated region
    $region22: #{tpu_custom_call.1} parent=1 // pred_check
      _
    $region23: #{tpu_custom_call.1} parent=1 // pred_check_branch
      %283 = sbr.rel (0) target = $region25
    $region24: #{tpu_custom_call.1} parent=1 // pred_region
      %s285 = ssub.s32 16, 16
      %286 = vsyncadd [#allocation3], %s285
      %s288 = sshll.u32 [#allocation2], 4
      %s289 = int_to_ptr.vmem [resolvable:$true] %s288
      %291 = dma.vmem_to_hbm [thread:$0]  %s289, 16, %s5, [#allocation3]
    $region25: #{tpu_custom_call.1} parent=1 // pred_fallthru
      _
    // Predicated region
    $region26: #{tpu_custom_call.1} parent=1 // pred_check
      _
    $region27: #{tpu_custom_call.1} parent=1 // pred_check_branch
      %293 = sbr.rel (0) target = $region29
    $region28: #{tpu_custom_call.1} parent=1 // pred_region
      %294 = dma.done [#allocation3], 16
    $region29: #{tpu_custom_call.1} parent=1 // pred_fallthru
      _
    %295 = vsyncpa [#allocation3], 1

</llo_original>
